<compile_context>
chip_gen: v6e
topology: v6e:2x2x1
jax: 0.10.0
libtpu: 0.0.40
codegen_flags: <defaults>
</compile_context>

<pallas_src>
import jax
import jax.numpy as jnp
from jax.experimental import pallas as pl
from jax.experimental.pallas import tpu as pltpu

DROP_P = 0.1                                      # nn.Dropout(0.1)
_KEEP_SCALE = 1.0 / (1.0 - DROP_P)                # python float -> jaxpr literal
_DROP_THRESH_U32 = int(round(DROP_P * (1 << 32)))  # P(u32 < t) = 0.1
_DROP_THRESH_U8 = int(round(DROP_P * (1 << 8)))    # = 26, P(u8 < 26) ~ 0.1016


def _round_up(x, m):
    return (x + m - 1) // m * m


def _linear_relu(x_ref, w_ref, b_ref):
    y = jnp.dot(x_ref[...], w_ref[...], preferred_element_type=jnp.float32)
    return jnp.maximum(y + b_ref[...], 0.0)


def _block_kernel_eval(x_ref, w_ref, b_ref, o_ref):
    """relu(x @ W + b); Dropout is identity at inference."""
    o_ref[...] = _linear_relu(x_ref, w_ref, b_ref).astype(o_ref.dtype)


def _block_kernel_train_prng(seed_ref, x_ref, w_ref, b_ref, o_ref):
    """relu(x @ W + b) with inverted dropout; mask drawn from on-chip PRNG."""
    y = _linear_relu(x_ref, w_ref, b_ref)
    # Unique seed per (row-tile, col-tile) grid point.
    pltpu.prng_seed(seed_ref[0]
                    + pl.program_id(0) * pl.num_programs(1)
                    + pl.program_id(1))
    bits = pltpu.bitcast(pltpu.prng_random_bits(o_ref.shape), jnp.uint32)
    scale = jnp.where(bits >= _DROP_THRESH_U32, _KEEP_SCALE, 0.0)
    o_ref[...] = (y * scale).astype(o_ref.dtype)


def _block_kernel_train_bits(x_ref, w_ref, b_ref, bits_ref, o_ref):
    """Fallback (non-TPU / interpreter): dropout mask streamed as uint8 bits."""
    y = _linear_relu(x_ref, w_ref, b_ref)
    scale = jnp.where(bits_ref[...] >= _DROP_THRESH_U8, _KEEP_SCALE, 0.0)
    o_ref[...] = (y * scale).astype(o_ref.dtype)


def block_forward(x, w, b, *, key=None, training=False, out_dtype=None,
                  tm_max=512, vmem_budget_bytes=24 * (1 << 20)):
    """Pallas implementation of Block.forward: Dropout(ReLU(x @ W + b), p=0.1).

    x: (B, in_dim)       — hand in bf16-stored activations for bandwidth.
    w: (in_dim, out_dim) — PyTorch weight transposed; bf16 storage welcome.
    b: (out_dim,)
    out_dtype: storage dtype of the output (default x.dtype); pass bf16 when
        the consumer accepts it to halve store traffic.
    tm_max: max row-tile; raise to 1024 on 128-MiB-VMEM parts (v5e/v6e).
    vmem_budget_bytes: working-set target. 24 MiB fits the default scoped VMEM
        on every generation; on v5e/v6e raise it (and the weight then stays
        resident instead of being N-tiled).
    """
    B, in_dim = x.shape
    in_dim_w, out_dim = w.shape
    assert in_dim == in_dim_w
    if out_dtype is None:
        out_dtype = x.dtype

    on_tpu = jax.default_backend() == "tpu"
    use_inkernel_prng = training and on_tpu
    streamed_bits = training and not on_tpu

    x_item = x.dtype.itemsize
    w_item = w.dtype.itemsize
    o_item = jnp.dtype(out_dtype).itemsize

    # ---- row tile: multiple of 32 (int8-friendly), >=2 grid steps when B
    # allows so the "parallel" row axis can shard across v7x's 2 TensorCores.
    if B > 8:
        tm = _round_up(pl.cdiv(B, 2), 32)
        tm = min(tm, tm_max, _round_up(B, 32))
    else:
        tm = min(_round_up(B, 8), tm_max)

    # ---- out-dim tile: keep the full (padded) width if it fits the VMEM
    # budget, otherwise tile N.  W/b are single-buffered when grid_n == 1.
    out_pad = _round_up(out_dim, 128)
    bits_bytes = 1 if streamed_bits else 0

    def _vmem_need(tn_, grid_n_):
        wbufs = 1 if grid_n_ == 1 else 2
        need = 2 * tm * in_dim * x_item           # x, double-buffered
        need += wbufs * in_dim * tn_ * w_item     # W
        need += wbufs * tn_ * 4                   # bias (f32)
        need += 2 * tm * tn_ * o_item             # out, double-buffered
        need += 2 * tm * tn_ * bits_bytes         # streamed dropout bits
        return need

    tn = out_pad
    for cand in (out_pad, 2048, 1024, 512, 256):
        if cand > out_pad:
            continue
        tn = cand
        if _vmem_need(cand, pl.cdiv(out_pad, cand)) <= vmem_budget_bytes:
            break
    out_pad = _round_up(out_dim, tn)      # lane-dense, divisible by tn
    grid_n = out_pad // tn

    # ---- pad operands (zero columns of W/b produce zero outputs, sliced off).
    if out_pad != out_dim:
        w = jnp.pad(w, ((0, 0), (0, out_pad - out_dim)))
        b = jnp.pad(b, (0, out_pad - out_dim))
    b2 = b.reshape(1, out_pad).astype(jnp.float32)

    B_pad = _round_up(B, tm)
    if B_pad != B:
        x = jnp.pad(x, ((0, B_pad - B), (0, 0)))
    grid_m = B_pad // tm
    grid = (grid_m, grid_n)

    # Single-buffer the weight/bias when their block index is constant over the
    # whole grid: double-buffering buys zero overlap, only VMEM.  (Hint is a
    # TPU pipeliner knob; skipped on non-TPU/interpreter backends.)
    wb_kwargs = {}
    if on_tpu and grid_n == 1:
        wb_kwargs = {"pipeline_mode": pl.Buffered(1)}

    in_specs = [
        pl.BlockSpec((tm, in_dim), lambda i, j: (i, 0)),
        pl.BlockSpec((in_dim, tn), lambda i, j: (0, j), **wb_kwargs),
        pl.BlockSpec((1, tn), lambda i, j: (0, j), **wb_kwargs),
    ]
    args = [x, w, b2]
    kernel = _block_kernel_eval

    if use_inkernel_prng:
        if key is None:
            key = jax.random.PRNGKey(0)
        seed = jax.random.randint(key, (1,), 0, 2**31 - 1, dtype=jnp.int32)
        in_specs = [pl.BlockSpec(memory_space=pltpu.MemorySpace.SMEM)] + in_specs
        args = [seed] + args
        kernel = _block_kernel_train_prng
    elif streamed_bits:
        # TODO(synk): PyTorch's dropout RNG stream cannot be matched
        # bit-for-bit; this fallback reproduces the distributional semantics.
        if key is None:
            key = jax.random.PRNGKey(0)
        bits = jax.random.bits(key, (B_pad, out_pad), dtype=jnp.uint8)
        in_specs = in_specs + [pl.BlockSpec((tm, tn), lambda i, j: (i, j))]
        args = args + [bits]
        kernel = _block_kernel_train_bits

    bytes_in = sum(int(a.size) * a.dtype.itemsize for a in args)
    bytes_out = B_pad * out_pad * o_item
    cost = pl.CostEstimate(
        flops=2 * B_pad * in_dim * out_pad,
        transcendentals=0,
        bytes_accessed=bytes_in + bytes_out,
    )

    out = pl.pallas_call(
        kernel,
        out_shape=jax.ShapeDtypeStruct((B_pad, out_pad), out_dtype),
        grid=grid,
        in_specs=in_specs,
        out_specs=pl.BlockSpec((tm, tn), lambda i, j: (i, j)),
        compiler_params=pltpu.CompilerParams(
            dimension_semantics=("parallel", "parallel"),
            vmem_limit_bytes=int(vmem_budget_bytes) + 8 * (1 << 20),
        ),
        cost_estimate=cost,
    )(*args)

    return out[:B, :out_dim]


if __name__ == "__main__":
    key = jax.random.PRNGKey(0)
    kx, kw, kb, kd = jax.random.split(key, 4)

    B, in_dim, out_dim = 128, 32, 64

    x = jax.random.normal(kx, (B, in_dim), dtype=jnp.float32)
    # PyTorch Linear stores weight as (out, in); the kernel takes (in, out).
    w_torch_layout = jax.random.normal(kw, (out_dim, in_dim), dtype=jnp.float32) * 0.05
    b = jax.random.normal(kb, (out_dim,), dtype=jnp.float32) * 0.05
    w = w_torch_layout.T

    # Eval-mode forward (Dropout is identity at inference).
    y_eval = jax.block_until_ready(block_forward(x, w, b, training=False))
    y_ref = jnp.maximum(x @ w + b[None, :], 0.0)
    assert y_eval.shape == (B, out_dim)
    assert bool(jnp.allclose(y_eval, y_ref, atol=1e-5, rtol=1e-5)), "eval mismatch"

    # bf16-stored inputs + bf16 output (the bandwidth path); loose tolerance.
    y_bf16 = jax.block_until_ready(
        block_forward(x.astype(jnp.bfloat16), w.astype(jnp.bfloat16), b,
                      training=False, out_dtype=jnp.bfloat16))
    assert bool(jnp.allclose(y_bf16.astype(jnp.float32), y_ref,
                             atol=5e-2, rtol=5e-2)), "bf16 mismatch"

    # Train-mode forward (inverted dropout, p=0.1, scale 1/0.9).
    y_train = jax.block_until_ready(
        block_forward(x, w, b, key=kd, training=True))
    dropped = jnp.isclose(y_train, 0.0, atol=1e-6)
    kept = jnp.isclose(y_train, y_eval / (1.0 - DROP_P), atol=1e-4, rtol=1e-4)
    assert bool(jnp.all(dropped | kept)), "dropout invariant violated"
    pos = y_ref > 1e-6
    drop_rate = float(jnp.sum(dropped & pos) / jnp.maximum(jnp.sum(pos), 1))
    assert 0.01 < drop_rate < 0.3, f"dropout rate {drop_rate} implausible"

    print("KERNEL_OK")
</pallas_src>

<mosaic_0001>
module attributes {stable_mosaic.version = 11 : i64} {
  func.func @_block_kernel_eval(%arg0: i32, %arg1: i32, %arg2: memref<64x32xf32, #tpu.memory_space<vmem>>, %arg3: memref<32x128xf32, #tpu.memory_space<vmem>>, %arg4: memref<1x128xf32, #tpu.memory_space<vmem>>, %arg5: memref<64x128xf32, #tpu.memory_space<vmem>>) attributes {dimension_semantics = [#tpu.dimension_semantics<parallel>, #tpu.dimension_semantics<parallel>], iteration_bounds = array<i64: 2, 1>, scalar_prefetch = 0 : i64, scratch_operands = 0 : i64, tpu.core_type = #tpu.core_type<tc>, window_params = [{transform_indices = @transform_0, window_bounds = array<i64: 64, 32>}, {transform_indices = @transform_1, window_bounds = array<i64: 32, 128>}, {transform_indices = @transform_2, window_bounds = array<i64: 1, 128>}, {transform_indices = @transform_3, window_bounds = array<i64: 64, 128>}]} {
    %c0 = arith.constant 0 : index
    %c0_0 = arith.constant 0 : index
    %0 = vector.load %arg2[%c0, %c0_0] : memref<64x32xf32, #tpu.memory_space<vmem>>, vector<64x32xf32>
    %c0_1 = arith.constant 0 : index
    %c0_2 = arith.constant 0 : index
    %1 = vector.load %arg3[%c0_1, %c0_2] : memref<32x128xf32, #tpu.memory_space<vmem>>, vector<32x128xf32>
    %cst = arith.constant dense<0.000000e+00> : vector<64x128xf32>
    %2 = tpu.matmul %0, %1, %cst {dimension_numbers = #tpu.dot_dimension_numbers<[1], [0], [0], [1], [0, 0, 1, 1], [], []>} : vector<64x32xf32>, vector<32x128xf32>, vector<64x128xf32> -> vector<64x128xf32>
    %c0_3 = arith.constant 0 : index
    %c0_4 = arith.constant 0 : index
    %3 = vector.load %arg4[%c0_3, %c0_4] : memref<1x128xf32, #tpu.memory_space<vmem>>, vector<1x128xf32>
    %4 = vector.broadcast %3 : vector<1x128xf32> to vector<64x128xf32>
    %5 = arith.addf %2, %4 : vector<64x128xf32>
    %cst_5 = arith.constant 0.000000e+00 : f32
    %6 = vector.broadcast %cst_5 : f32 to vector<64x128xf32>
    %7 = arith.maximumf %5, %6 : vector<64x128xf32>
    %c0_6 = arith.constant 0 : index
    %c0_7 = arith.constant 0 : index
    %8 = vector.load %arg5[%c0_6, %c0_7] : memref<64x128xf32, #tpu.memory_space<vmem>>, vector<64x128xf32>
    tpu.vector_store %arg5[%c0_6, %c0_7], %7 {strides = array<i32>} : memref<64x128xf32, #tpu.memory_space<vmem>>, vector<64x128xf32>,
    return
  }
  func.func @transform_0(%arg0: i32, %arg1: i32) -> (i32, i32) {
    %c0_i32 = arith.constant 0 : i32
    %c0_i32_0 = arith.constant 0 : i32
    return %arg0, %c0_i32 : i32, i32
  }
  func.func @transform_1(%arg0: i32, %arg1: i32) -> (i32, i32) {
    %c0_i32 = arith.constant 0 : i32
    %c0_i32_0 = arith.constant 0 : i32
    return %c0_i32, %arg1 : i32, i32
  }
  func.func @transform_2(%arg0: i32, %arg1: i32) -> (i32, i32) {
    %c0_i32 = arith.constant 0 : i32
    %c0_i32_0 = arith.constant 0 : i32
    return %c0_i32, %arg1 : i32, i32
  }
  func.func @transform_3(%arg0: i32, %arg1: i32) -> (i32, i32) {
    %c0_i32 = arith.constant 0 : i32
    return %arg0, %arg1 : i32, i32
  }
}

</mosaic_0001>

<llo_original>
// kernel: tpu_custom_call.1
$region0: #{tpu_custom_call.1}
  #allocation0 [shape = 'u32[]', space=smem, size = 0x4, offset = 0x4, fixed_abs, tag = 'smem constant byte address 0x4 - core index']
  #allocation1 [shape = 'u32[144,128]{1,0:T(1,128)}', space=vmem, size = 0x12000, scoped, tag = 'internal scratch']
  %s0 = inlined_call_operand.vmem [shape: f32[128,32], index: 0, kind: input, shape index: {}]
  %s1 = inlined_call_operand.vmem [shape: f32[32,128], index: 1, kind: input, shape index: {}]
  %s2 = inlined_call_operand.vmem [shape: f32[1,128], index: 2, kind: input, shape index: {}]
  %s3 = inlined_call_operand.hbm [shape: f32[128,128], index: 3, kind: output, shape index: {}]
  %s4 = sld [smem:[#allocation0]]
  $region45: #{tpu_custom_call.1} parent=0
    _
  %s6 = ssub.s32 1, %s4
  %s7 = scalar_select 0, %s6, %s4
  $region1: #{tpu_custom_call.1} parent=0
    #allocation2 [shape = 'u8[65536]{0}', space=vmem, size = 0x10000, scoped, tag = 'output window, operand 0']
    #allocation3 [shape = 's32[2]{0}', space=sflag, size = 0x8, scoped, tag = 'scoped memory for tpu_custom_call.1']
    %8 = vsyncpa [#allocation3], 0
    %s9 = scalar_lea.sflag [#allocation3], 1
    %10 = vsyncpa %s9, 0
    loop: start=0, step=1, limit=4
    $region2: #{tpu_custom_call.1} parent=1 // loop_pre_header
      _
    $region3: #{tpu_custom_call.1} parent=1 // loop_header
      %s12 = sphi 0, %s16
      %p13 = scmp.ge.s32.totalorder %s12, 4
      %s19 = sphi 0, %s31
      %s20 = sphi 0, %s27
      %s21 = sphi 0, %s19
      %s22 = sphi 0, %s20
      %s23 = sphi 0, %s21
      %s24 = sphi 0, %s22
      %s34 = sphi 0, %s36
      %s37 = sphi 0, %s34
      %s38 = sphi 0, %s37
      %s54 = sphi 0, %s38
      %s60 = sphi 0, %s62
      %s63 = sphi 0, %s60
      %s64 = sphi 0, %s63
      %s80 = sphi 0, %s64
      %s86 = sphi 0, %s88
      %s89 = sphi 0, %s86
      %s90 = sphi 0, %s89
      %s106 = sphi 0, %s90
      %s114 = sphi 0, %s116
      %s117 = sphi 0, %s114
      %s118 = sphi 0, %s117
      %s134 = sphi 0, %s118
    $region4: #{tpu_custom_call.1} parent=1 // loop_header_branch
      %15 = sbr.rel (%p13) target = $region8
    $region5: #{tpu_custom_call.1} parent=1 // loop_body
      %s17 = ssub.s32 %s12, 1
      %s18 = ssub.s32 %s12, 2
      %s25 = sadd.s32 1, %s20
      %p26 = scmp.ge.s32.totalorder %s25, 1
      %s27 = scalar_select %p26, 0, %s25
      %s28 = sadd.s32 1, %s19
      %s29 = scalar_select %p26, %s28, %s19
      %p30 = scmp.ge.s32.totalorder %s29, 2
      %s31 = scalar_select %p30, 0, %s29
      %s32 = ssub.s32 %s19, %s31
      %p33 = scmp.eq.s32.totalorder %s32, 0
      %s35 = sadd.s32 %s34, 1
      %s36 = scalar_select %p33, %s34, %s35
      %p39 = pneg %p33
      %p40 = scmp.eq.s32.totalorder %s12, 1
      %p41 = por %p39, %p40
      %p42 = scmp.ne.s32.totalorder %s34, %s37
      %p43 = scmp.eq.s32.totalorder %s12, 0
      %p44 = por %p42, %p43
      %p45 = scmp.ne.s32.totalorder %s34, %s37
      %p46 = scmp.eq.s32.totalorder %s17, 1
      %p47 = por %p45, %p46
      %p48 = scmp.ne.s32.totalorder %s37, %s38
      %p49 = scmp.eq.s32.totalorder %s17, 0
      %p50 = por %p48, %p49
      %p51 = scmp.ne.s32.totalorder %s37, %s38
      %p52 = scmp.eq.s32.totalorder %s18, 1
      %p53 = por %p51, %p52
      %p55 = scmp.ne.s32.totalorder %s38, %s54
      %p56 = scmp.eq.s32.totalorder %s18, 0
      %p57 = por %p55, %p56
      %s58 = ssub.s32 %s20, %s27
      %p59 = scmp.eq.s32.totalorder %s58, 0
      %s61 = sadd.s32 %s60, 1
      %s62 = scalar_select %p59, %s60, %s61
      %p65 = pneg %p59
      %p66 = scmp.eq.s32.totalorder %s12, 1
      %p67 = por %p65, %p66
      %p68 = scmp.ne.s32.totalorder %s60, %s63
      %p69 = scmp.eq.s32.totalorder %s12, 0
      %p70 = por %p68, %p69
      %p71 = scmp.ne.s32.totalorder %s60, %s63
      %p72 = scmp.eq.s32.totalorder %s17, 1
      %p73 = por %p71, %p72
      %p74 = scmp.ne.s32.totalorder %s63, %s64
      %p75 = scmp.eq.s32.totalorder %s17, 0
      %p76 = por %p74, %p75
      %p77 = scmp.ne.s32.totalorder %s63, %s64
      %p78 = scmp.eq.s32.totalorder %s18, 1
      %p79 = por %p77, %p78
      %p81 = scmp.ne.s32.totalorder %s64, %s80
      %p82 = scmp.eq.s32.totalorder %s18, 0
      %p83 = por %p81, %p82
      %s84 = ssub.s32 %s20, %s27
      %p85 = scmp.eq.s32.totalorder %s84, 0
      %s87 = sadd.s32 %s86, 1
      %s88 = scalar_select %p85, %s86, %s87
      %p91 = pneg %p85
      %p92 = scmp.eq.s32.totalorder %s12, 1
      %p93 = por %p91, %p92
      %p94 = scmp.ne.s32.totalorder %s86, %s89
      %p95 = scmp.eq.s32.totalorder %s12, 0
      %p96 = por %p94, %p95
      %p97 = scmp.ne.s32.totalorder %s86, %s89
      %p98 = scmp.eq.s32.totalorder %s17, 1
      %p99 = por %p97, %p98
      %p100 = scmp.ne.s32.totalorder %s89, %s90
      %p101 = scmp.eq.s32.totalorder %s17, 0
      %p102 = por %p100, %p101
      %p103 = scmp.ne.s32.totalorder %s89, %s90
      %p104 = scmp.eq.s32.totalorder %s18, 1
      %p105 = por %p103, %p104
      %p107 = scmp.ne.s32.totalorder %s90, %s106
      %p108 = scmp.eq.s32.totalorder %s18, 0
      %p109 = por %p107, %p108
      %s110 = ssub.s32 %s19, %s31
      %s111 = ssub.s32 %s20, %s27
      %s112 = sor.u32 %s110, %s111
      %p113 = scmp.eq.s32.totalorder %s112, 0
      %s115 = sadd.s32 %s114, 1
      %s116 = scalar_select %p113, %s114, %s115
      %p119 = pneg %p113
      %p120 = scmp.eq.s32.totalorder %s12, 1
      %p121 = por %p119, %p120
      %p122 = scmp.ne.s32.totalorder %s114, %s117
      %p123 = scmp.eq.s32.totalorder %s12, 0
      %p124 = por %p122, %p123
      %p125 = scmp.ne.s32.totalorder %s114, %s117
      %p126 = scmp.eq.s32.totalorder %s17, 1
      %p127 = por %p125, %p126
      %p128 = scmp.ne.s32.totalorder %s117, %s118
      %p129 = scmp.eq.s32.totalorder %s17, 0
      %p130 = por %p128, %p129
      %p131 = scmp.ne.s32.totalorder %s117, %s118
      %p132 = scmp.eq.s32.totalorder %s18, 1
      %p133 = por %p131, %p132
      %p135 = scmp.ne.s32.totalorder %s118, %s134
      %p136 = scmp.eq.s32.totalorder %s18, 0
      %p137 = por %p135, %p136
      %p138 = scmp.le.s32.totalorder 1, %s12
      %p139 = scmp.lt.s32.totalorder %s12, 3
      %p140 = pnand %p138, %p139
      %p141 = pneg %p140
      // Predicated region
      $region9: #{tpu_custom_call.1} parent=5 // pred_check
        _
      $region10: #{tpu_custom_call.1} parent=5 // pred_check_branch
        %143 = sbr.rel (%p140) target = $region12
      $region11: #{tpu_custom_call.1} parent=5 // pred_region
        %s144 = ssub.s32 %s12, 1
        // Predicated region
        $region13: #{tpu_custom_call.1} parent=11 // pred_check
          %p145 = pneg %p76
        $region14: #{tpu_custom_call.1} parent=11 // pred_check_branch
          %147 = sbr.rel (%p145) target = $region16
        $region15: #{tpu_custom_call.1} parent=11 // pred_region
          %p148 = scmp.lt.s32.totalorder %s22, 0
          %s149 = scalar_select %p148, %s22, 0
          %s150 = smul.addr %s149, 8
          %s151 = scalar_lea.vmem %s1, %s150
        $region16: #{tpu_custom_call.1} parent=11 // pred_fallthru
          _
        // Predicated region
        $region17: #{tpu_custom_call.1} parent=11 // pred_check
          %p152 = pneg %p102
        $region18: #{tpu_custom_call.1} parent=11 // pred_check_branch
          %154 = sbr.rel (%p152) target = $region20
        $region19: #{tpu_custom_call.1} parent=11 // pred_region
          %p155 = scmp.lt.s32.totalorder %s22, 0
          %s156 = scalar_select %p155, %s22, 0
          %s157 = scalar_lea.vmem %s2, %s156
        $region20: #{tpu_custom_call.1} parent=11 // pred_fallthru
          _
      $region12: #{tpu_custom_call.1} parent=5 // pred_fallthru
        _
      %p158 = scmp.lt.s32.totalorder %s12, 2
      // Predicated region
      $region21: #{tpu_custom_call.1} parent=5 // pred_check
        %p159 = pneg %p158
      $region22: #{tpu_custom_call.1} parent=5 // pred_check_branch
        %161 = sbr.rel (%p159) target = $region24
      $region23: #{tpu_custom_call.1} parent=5 // pred_region
        // Predicated region
        $region25: #{tpu_custom_call.1} parent=23 // pred_check
          %p162 = pneg %p44
        $region26: #{tpu_custom_call.1} parent=23 // pred_check_branch
          %164 = sbr.rel (%p162) target = $region28
        $region27: #{tpu_custom_call.1} parent=23 // pred_region
          %s165 = smul.u32 8, %s19
          %p166 = scmp.lt.s32.totalorder %s165, 15
          %s167 = scalar_select %p166, %s165, 15
          %s168 = smul.addr %s167, 8
          %s169 = scalar_lea.vmem %s0, %s168
          %s170 = smul.u32 8, %s19
        $region28: #{tpu_custom_call.1} parent=23 // pred_fallthru
          _
      $region24: #{tpu_custom_call.1} parent=5 // pred_fallthru
        _
      %p171 = scmp.le.s32.totalorder 1, %s12
      %p172 = scmp.lt.s32.totalorder %s12, 3
      %p173 = pnand %p171, %p172
      %p174 = pneg %p173
      // Predicated region
      $region29: #{tpu_custom_call.1} parent=5 // pred_check
        _
      $region30: #{tpu_custom_call.1} parent=5 // pred_check_branch
        %176 = sbr.rel (%p173) target = $region32
      $region31: #{tpu_custom_call.1} parent=5 // pred_region
        %s177 = ssub.s32 %s12, 1
        %s178 = smul.u32 8, %s21
        %p179 = scmp.lt.s32.totalorder %s178, 15
        %s180 = scalar_select %p179, %s178, 15
        %s181 = smul.addr %s180, 8
        %s182 = scalar_lea.vmem %s0, %s181
        %p183 = pneg %p50
        %p184 = pneg %p47
        %p185 = scmp.lt.s32.totalorder %s22, 0
        %s186 = scalar_select %p185, %s22, 0
        %s187 = smul.addr %s186, 8
        %s188 = scalar_lea.vmem %s1, %s187
        %p189 = pneg %p76
        %p190 = pneg %p73
        %p191 = scmp.lt.s32.totalorder %s22, 0
        %s192 = scalar_select %p191, %s22, 0
        %s193 = scalar_lea.vmem %s2, %s192
        %p194 = pneg %p102
        %p195 = pneg %p99
        %p196 = pneg %p130
        %p197 = pneg %p127
        %s198 = sand.u32 %s117, 1
        %s199 = scalar_lea.sflag [#allocation3], %s198
        %s200 = sand.u32 %s117, 1
        %s201 = smul.addr %s200, 64
        %s202 = scalar_lea.vmem [#allocation2], %s201
        %s203 = smul.u32 8, %s21
        %p204 = scmp.lt.s32.totalorder %s203, 15
        %s205 = scalar_select %p204, %s203, 15
        %s206 = smul.addr %s205, 8
        %s207 = scalar_lea.vmem %s0, %s206
        %s208 = smul.u32 8, %s21
        %p209 = scmp.lt.s32.totalorder %s22, 0
        %s210 = scalar_select %p209, %s22, 0
        %s211 = smul.addr %s210, 8
        %s212 = scalar_lea.vmem %s1, %s211
        %p213 = scmp.lt.s32.totalorder %s22, 0
        %s214 = scalar_select %p213, %s22, 0
        %s215 = scalar_lea.vmem %s2, %s214
        %s216 = smul.u32 8, %s21
        %v217 = vld [vmem:[%s207] sm:$0xff]
        %v218 = vld [vmem:[%s207 + $0x8] sm:$0xff]
        %v219 = vld [vmem:[%s207 + $0x10] sm:$0xff]
        %v220 = vld [vmem:[%s207 + $0x18] sm:$0xff]
        %v221 = vld [vmem:[%s207 + $0x20] sm:$0xff]
        %v222 = vld [vmem:[%s207 + $0x28] sm:$0xff]
        %v223 = vld [vmem:[%s207 + $0x30] sm:$0xff]
        %v224 = vld [vmem:[%s207 + $0x38] sm:$0xff]
        %v225 = vld [vmem:[%s212] sm:$0xff]
        %v226 = vld [vmem:[%s212 + $0x8] sm:$0xff]
        %v227 = vld [vmem:[%s212 + $0x10] sm:$0xff]
        %v228 = vld [vmem:[%s212 + $0x18] sm:$0xff]
        %v229 = vld [vmem:[%s215] sm:$0x1]
        %v231 = vlaneseq
        %v232 = vshrl.u32 %v231, 7
        %v233 = vsub.s32 0, %v232
        %v234 = vrot.slane %v229, %v233
        %vm236 = vcmask 261120
        %v238 = vsel %vm236, %v217, 0
        %v241 = vsel %vm236, %v218, 0
        %v244 = vsel %vm236, %v219, 0
        %v247 = vsel %vm236, %v220, 0
        %v250 = vsel %vm236, %v221, 0
        %v253 = vsel %vm236, %v222, 0
        %v256 = vsel %vm236, %v223, 0
        %v259 = vsel %vm236, %v224, 0
        %261 = vmatprep.subr.mxu0 0.0
        %262 = vmatpush1.msra.mxu0 0.0
        %263 = vmatprep.subr.mxu0 0.0
        %264 = vmatpush1.msra.mxu0 0.0
        %265 = vmatprep.subr.mxu0 0.0
        %266 = vmatpush1.msra.mxu0 0.0
        %267 = vmatprep.subr.mxu0 0.0
        %268 = vmatpush1.msra.mxu0 0.0
        %269 = vmatprep.subr.mxu0 0.0
        %270 = vmatpush1.msra.mxu0 0.0
        %271 = vmatprep.subr.mxu0 0.0
        %272 = vmatpush1.msra.mxu0 0.0
        %273 = vmatprep.subr.mxu0 0.0
        %274 = vmatpush1.msra.mxu0 0.0
        %275 = vmatprep.subr.mxu0 0.0
        %276 = vmatpush1.msra.mxu0 0.0
        %277 = vmatprep.subr.mxu0 0.0
        %278 = vmatpush1.msra.mxu0 0.0
        %279 = vmatprep.subr.mxu0 0.0
        %280 = vmatpush1.msra.mxu0 0.0
        %281 = vmatprep.subr.mxu0 0.0
        %282 = vmatpush1.msra.mxu0 0.0
        %283 = vmatprep.subr.mxu0 0.0
        %284 = vmatpush1.msra.mxu0 0.0
        %285 = vmatprep.subr.mxu0 0.0
        %286 = vmatpush1.msra.mxu0 %v228
        %287 = vmatprep.subr.mxu0 0.0
        %288 = vmatpush1.msra.mxu0 %v227
        %289 = vmatprep.subr.mxu0 0.0
        %290 = vmatpush1.msra.mxu0 %v226
        %291 = vmatprep.subr.mxu0 0.0
        %292 = vmatpush1.msra.mxu0 %v225
        %293 = vmatprep.subr.mxu0 0.0
        %294 = vmatpush2.msra.mxu0 0.0
        %295 = vmatprep.subr.mxu0 0.0
        %296 = vmatpush2.msra.mxu0 0.0
        %297 = vmatprep.subr.mxu0 0.0
        %298 = vmatpush2.msra.mxu0 0.0
        %299 = vmatprep.subr.mxu0 0.0
        %300 = vmatpush2.msra.mxu0 0.0
        %301 = vmatprep.subr.mxu0 0.0
        %302 = vmatpush2.msra.mxu0 0.0
        %303 = vmatprep.subr.mxu0 0.0
        %304 = vmatpush2.msra.mxu0 0.0
        %305 = vmatprep.subr.mxu0 0.0
        %306 = vmatpush2.msra.mxu0 0.0
        %307 = vmatprep.subr.mxu0 0.0
        %308 = vmatpush2.msra.mxu0 0.0
        %309 = vmatprep.subr.mxu0 0.0
        %310 = vmatpush2.msra.mxu0 0.0
        %311 = vmatprep.subr.mxu0 0.0
        %312 = vmatpush2.msra.mxu0 0.0
        %313 = vmatprep.subr.mxu0 0.0
        %314 = vmatpush2.msra.mxu0 0.0
        %315 = vmatprep.subr.mxu0 0.0
        %316 = vmatpush2.msra.mxu0 0.0
        %317 = vmatprep.subr.mxu0 0.0
        %318 = vmatpush2.msra.mxu0 0.0
        %319 = vmatprep.subr.mxu0 0.0
        %320 = vmatpush2.msra.mxu0 0.0
        %321 = vmatprep.subr.mxu0 0.0
        %322 = vmatpush2.msra.mxu0 0.0
        %323 = vmatprep.subr.mxu0 0.0
        %324 = vmatpush2.msra.mxu0 0.0
        %325 = vmatprep.mubr.f32.mxu0 0.0
        %326 = vmatmul.mubr.f32.gmra.mxu0 %v238
        %v327 = vpop.f32.mrf.mxu0
        %v328 = vadd.f32 %v234, %v327
        %v329 = vpop.f32.mrf.mxu0
        %330 = vmatprep.mubr.f32.mxu0 0.0
        %331 = vmatmul.mubr.f32.gmra.mxu0 %v241
        %v332 = vpop.f32.mrf.mxu0
        %v333 = vadd.f32 %v234, %v332
        %v334 = vpop.f32.mrf.mxu0
        %335 = vmatprep.mubr.f32.mxu0 0.0
        %336 = vmatmul.mubr.f32.gmra.mxu0 %v244
        %v337 = vpop.f32.mrf.mxu0
        %v338 = vadd.f32 %v234, %v337
        %v339 = vpop.f32.mrf.mxu0
        %340 = vmatprep.mubr.f32.mxu0 0.0
        %341 = vmatmul.mubr.f32.gmra.mxu0 %v247
        %v342 = vpop.f32.mrf.mxu0
        %v343 = vadd.f32 %v234, %v342
        %v344 = vpop.f32.mrf.mxu0
        %345 = vmatprep.mubr.f32.mxu0 0.0
        %346 = vmatmul.mubr.f32.gmra.mxu0 %v250
        %v347 = vpop.f32.mrf.mxu0
        %v348 = vadd.f32 %v234, %v347
        %v349 = vpop.f32.mrf.mxu0
        %350 = vmatprep.mubr.f32.mxu0 0.0
        %351 = vmatmul.mubr.f32.gmra.mxu0 %v253
        %v352 = vpop.f32.mrf.mxu0
        %v353 = vadd.f32 %v234, %v352
        %v354 = vpop.f32.mrf.mxu0
        %355 = vmatprep.mubr.f32.mxu0 0.0
        %356 = vmatmul.mubr.f32.gmra.mxu0 %v256
        %v357 = vpop.f32.mrf.mxu0
        %v358 = vadd.f32 %v234, %v357
        %v359 = vpop.f32.mrf.mxu0
        %360 = vmatprep.mubr.f32.mxu0 0.0
        %361 = vmatmul.mubr.f32.gmra.mxu0 %v259
        %v362 = vpop.f32.mrf.mxu0
        %v363 = vadd.f32 %v234, %v362
        %v364 = vpop.f32.mrf.mxu0
        %365 = vdwg.mxu0
        %v366 = vmax.f32 %v328, 0.0
        %v367 = vmax.f32 %v333, 0.0
        %v368 = vmax.f32 %v338, 0.0
        %v369 = vmax.f32 %v343, 0.0
        %v370 = vmax.f32 %v348, 0.0
        %v371 = vmax.f32 %v353, 0.0
        %v372 = vmax.f32 %v358, 0.0
        %v373 = vmax.f32 %v363, 0.0
        %374 = vst [vmem:[%s202] sm:$0xff] %v366
        %375 = vst [vmem:[%s202 + $0x8] sm:$0xff] %v367
        %376 = vst [vmem:[%s202 + $0x10] sm:$0xff] %v368
        %377 = vst [vmem:[%s202 + $0x18] sm:$0xff] %v369
        %378 = vst [vmem:[%s202 + $0x20] sm:$0xff] %v370
        %379 = vst [vmem:[%s202 + $0x28] sm:$0xff] %v371
        %380 = vst [vmem:[%s202 + $0x30] sm:$0xff] %v372
        %381 = vst [vmem:[%s202 + $0x38] sm:$0xff] %v373
        %s382 = sand.u32 %s117, 1
        %s383 = scalar_lea.sflag [#allocation3], %s382
        %s384 = sand.u32 %s117, 1
        %s385 = smul.addr %s384, 64
        %s386 = scalar_lea.vmem [#allocation2], %s385
        // Predicated region
        $region33: #{tpu_custom_call.1} parent=31 // pred_check
          %p387 = pneg %p127
        $region34: #{tpu_custom_call.1} parent=31 // pred_check_branch
          %389 = sbr.rel (%p387) target = $region36
        $region35: #{tpu_custom_call.1} parent=31 // pred_region
          %s390 = smul.u32 8, %s21
          %s392 = ssub.s32 1024, 1024
          %393 = vsyncadd %s383, %s392
          %s394 = sadd.s32 %s22, %s390
          %s395 = smul.addr %s394, 128
          %s396 = scalar_lea.hbm %s3, %s395
          %s397 = sshll.u32 %s386, 4
          %s398 = int_to_ptr.vmem [resolvable:$true] %s397
          %403 = dma.vmem_to_hbm [thread:$0]  %s398, 1024, %s396, %s383, 128, 128, 8
        $region36: #{tpu_custom_call.1} parent=31 // pred_fallthru
          _
      $region32: #{tpu_custom_call.1} parent=5 // pred_fallthru
        _
      %p404 = scmp.le.s32.totalorder 2, %s12
      // Predicated region
      $region37: #{tpu_custom_call.1} parent=5 // pred_check
        %p405 = pneg %p404
      $region38: #{tpu_custom_call.1} parent=5 // pred_check_branch
        %407 = sbr.rel (%p405) target = $region40
      $region39: #{tpu_custom_call.1} parent=5 // pred_region
        %s408 = ssub.s32 %s12, 2
        // Predicated region
        $region41: #{tpu_custom_call.1} parent=39 // pred_check
          %p409 = pneg %p133
        $region42: #{tpu_custom_call.1} parent=39 // pred_check_branch
          %411 = sbr.rel (%p409) target = $region44
        $region43: #{tpu_custom_call.1} parent=39 // pred_region
          %s412 = sand.u32 %s118, 1
          %s413 = scalar_lea.sflag [#allocation3], %s412
          %s414 = sand.u32 %s118, 1
          %s415 = smul.addr %s414, 64
          %s416 = scalar_lea.vmem [#allocation2], %s415
          %417 = dma.done %s413, 1024
        $region44: #{tpu_custom_call.1} parent=39 // pred_fallthru
          _
      $region40: #{tpu_custom_call.1} parent=5 // pred_fallthru
        _
    $region6: #{tpu_custom_call.1} parent=1 // loop_footer
      %s16 = sadd.s32 1, %s12
    $region7: #{tpu_custom_call.1} parent=1 // loop_footer_branch
      %11 = sbr.rel target = $region3
    $region8: #{tpu_custom_call.1} parent=1 // loop_exit
      _
    %418 = vsyncpa [#allocation3], 1
    %s419 = scalar_lea.sflag [#allocation3], 1
    %420 = vsyncpa %s419, 1

</llo_original>
